<compile_context>
chip_gen: v7x
topology: tpu7x:2x2x1
jax: 0.10.0
libtpu: 0.0.40
codegen_flags: <defaults>
</compile_context>

<pallas_src>
import functools

import jax
import jax.numpy as jnp
from jax.experimental import pallas as pl
from jax.experimental.pallas import tpu as pltpu


# --------------------------------------------------------------------------- #
# Kernels
# --------------------------------------------------------------------------- #
def _mlp_kernel_acc(x_ref, w1_ref, b1_ref, w2_ref, b2_ref, o_ref, acc_ref):
    # Variant with a separate f32 accumulator scratch (used when the output
    # dtype is not float32, e.g. bf16).
    # x_ref : (tm, dim)   input row tile (native dtype)
    # w1_ref: (dim, th)   fc1 weight chunk
    # b1_ref: (1, th)     fc1 bias chunk
    # w2_ref: (th, dim)   fc2 weight chunk
    # b2_ref: (1, dim)    fc2 bias (full)
    # o_ref : (tm, dim)   output tile
    # acc_ref: (tm, dim)  f32 accumulator scratch
    k = pl.program_id(1)
    nk = pl.num_programs(1)

    @pl.when(k == 0)
    def _():
        # Fold fc2 bias into the accumulator init: one add per output tile.
        acc_ref[...] = jnp.broadcast_to(
            b2_ref[...].astype(jnp.float32), acc_ref.shape)

    # fc1 chunk: native-dtype operands, f32 accumulation on the MXU.
    h = jnp.dot(x_ref[...], w1_ref[...], preferred_element_type=jnp.float32)
    h = h + b1_ref[...].astype(jnp.float32)

    # Exact (erf-based) GELU in f32, matching torch.nn.GELU() default.
    h = 0.5 * h * (1.0 + jax.lax.erf(h * 0.7071067811865476))

    # (dropout: identity in eval)

    # fc2 chunk: cast activations back to the weight dtype so bf16 weights use
    # the bf16 MXU path; accumulate in f32.
    acc_ref[...] += jnp.dot(h.astype(w2_ref.dtype), w2_ref[...],
                            preferred_element_type=jnp.float32)

    @pl.when(k == nk - 1)
    def _():
        # (dropout: identity in eval)
        o_ref[...] = acc_ref[...].astype(o_ref.dtype)


def _mlp_kernel_f32(x_ref, w1_ref, b1_ref, w2_ref, b2_ref, o_ref):
    # Variant for float32 output: the output block is revisited with the same
    # block index across k, so accumulate directly into it and skip the
    # separate acc scratch (saves tm*dim*4 B of VMEM).
    k = pl.program_id(1)

    @pl.when(k == 0)
    def _():
        o_ref[...] = jnp.broadcast_to(
            b2_ref[...].astype(jnp.float32), o_ref.shape)

    h = jnp.dot(x_ref[...], w1_ref[...], preferred_element_type=jnp.float32)
    h = h + b1_ref[...].astype(jnp.float32)
    h = 0.5 * h * (1.0 + jax.lax.erf(h * 0.7071067811865476))
    # (dropout: identity in eval)
    o_ref[...] += jnp.dot(h.astype(w2_ref.dtype), w2_ref[...],
                          preferred_element_type=jnp.float32)


# --------------------------------------------------------------------------- #
# Tiling / chip heuristics
# --------------------------------------------------------------------------- #
def _round_up(x, m):
    return (x + m - 1) // m * m


def _tpu_generation():
    try:
        kind = jax.devices()[0].device_kind.lower()
    except Exception:
        return "unknown"
    if "v5 lite" in kind or "v5e" in kind or "v5lite" in kind:
        return "v5e"
    if "v6" in kind:
        return "v6e"
    if "v7" in kind:
        return "v7x"
    return "unknown"


def _chip_config():
    gen = _tpu_generation()
    if gen == "v5e":
        # Already compute-bound at tm=256 (ridge ~240 FLOP/B); spend spare VMEM
        # on deeper weight-chunk buffering rather than larger tiles.
        return dict(tm=256, th=256, vmem=64 * 1024 * 1024,
                    weight_buffers=3, b2_buffers=None)
    if gen == "v6e":
        # Ridge ~650 FLOP/B with per-row-tile weight re-streams -> big row tile.
        return dict(tm=1024, th=256, vmem=100 * 1024 * 1024,
                    weight_buffers=None, b2_buffers=None)
    if gen == "v7x":
        # 64 MiB VMEM: th=256 weight chunks, single-buffered b2, tm as large as
        # the budget allows (768 target for bf16; auto-shrunk for f32).
        return dict(tm=768, th=256, vmem=56 * 1024 * 1024,
                    weight_buffers=None, b2_buffers=1)
    return dict(tm=512, th=256, vmem=64 * 1024 * 1024,
                weight_buffers=None, b2_buffers=None)


def _pick_tm(tm_target, dim_p, th_eff, itemsize, vmem_budget, needs_acc,
             weight_buffers):
    """Largest tm <= tm_target (multiple of 128 steps) whose working set fits."""
    wb = weight_buffers if weight_buffers is not None else 2

    def usage(tm):
        x_b = 2 * tm * dim_p * itemsize            # double-buffered input tile
        o_b = 2 * tm * dim_p * itemsize            # double-buffered output tile
        a_b = (tm * dim_p * 4) if needs_acc else 0  # f32 accumulator scratch
        w_b = wb * dim_p * th_eff * itemsize * 2    # W1 + W2 chunk buffers
        misc = 4 * 1024 * 1024                      # biases + compiler scratch
        return x_b + o_b + a_b + w_b + misc

    tm = max(128, tm_target)
    while tm > 128 and usage(tm) > vmem_budget:
        tm -= 128
    return tm


def _block_spec(block_shape, index_map, buffer_count=None):
    """BlockSpec with optional pipeline depth; degrades gracefully."""
    if buffer_count is not None and hasattr(pl, "Buffered"):
        try:
            return pl.BlockSpec(block_shape, index_map,
                                pipeline_mode=pl.Buffered(buffer_count))
        except TypeError:
            pass
    return pl.BlockSpec(block_shape, index_map)


# --------------------------------------------------------------------------- #
# Wrapper
# --------------------------------------------------------------------------- #
@functools.partial(jax.jit, static_argnames=("tm", "th"))
def mlp_pallas(x, w1, b1, w2, b2, *, tm=None, th=None):
    """x: (B, S, dim). w1: (dim, 4*dim), b1: (4*dim,), w2: (4*dim, dim), b2: (dim,)."""
    B, S, dim = x.shape
    hidden = w1.shape[1]
    N = B * S

    cfg = _chip_config()
    tm_target = tm if tm is not None else cfg["tm"]
    th_target = th if th is not None else cfg["th"]

    # Feature dims padded to multiples of 128 (lane-dense MXU/store tiles).
    dim_p = _round_up(dim, 128)
    th_eff = min(th_target, _round_up(hidden, 128))
    hid_p = _round_up(hidden, th_eff)

    itemsize = jnp.dtype(x.dtype).itemsize
    needs_acc = x.dtype != jnp.float32
    tm_fit = _pick_tm(tm_target, dim_p, th_eff, itemsize, cfg["vmem"],
                      needs_acc, cfg["weight_buffers"])
    tm_eff = min(tm_fit, _round_up(N, 8))
    n_p = _round_up(N, tm_eff)

    # Conditional padding: compiles away entirely for already-aligned shapes.
    x2d = x.reshape(N, dim)
    if (n_p, dim_p) != (N, dim):
        x2d = jnp.pad(x2d, ((0, n_p - N), (0, dim_p - dim)))
    w1_p = w1 if (dim_p, hid_p) == (dim, hidden) else jnp.pad(
        w1, ((0, dim_p - dim), (0, hid_p - hidden)))
    b1_p = b1.reshape(1, hidden)
    if hid_p != hidden:
        b1_p = jnp.pad(b1_p, ((0, 0), (0, hid_p - hidden)))
    w2_p = w2 if (hid_p, dim_p) == (hidden, dim) else jnp.pad(
        w2, ((0, hid_p - hidden), (0, dim_p - dim)))
    b2_p = b2.reshape(1, dim)
    if dim_p != dim:
        b2_p = jnp.pad(b2_p, ((0, 0), (0, dim_p - dim)))

    grid = (n_p // tm_eff, hid_p // th_eff)
    n_row_tiles = grid[0]

    # Honest HBM traffic: W1/W2/b1 are re-streamed once per row tile.
    weight_stream_bytes = n_row_tiles * (
        w1_p.size * jnp.dtype(w1_p.dtype).itemsize
        + w2_p.size * jnp.dtype(w2_p.dtype).itemsize
        + b1_p.size * jnp.dtype(b1_p.dtype).itemsize)
    cost = pl.CostEstimate(
        flops=4 * n_p * dim_p * hid_p,                 # two matmuls
        transcendentals=n_p * hid_p,                   # erf per hidden element
        bytes_accessed=(x2d.size * itemsize            # x read once
                        + n_p * dim_p * itemsize       # output written once
                        + weight_stream_bytes
                        + b2_p.size * jnp.dtype(b2_p.dtype).itemsize))

    in_specs = [
        pl.BlockSpec((tm_eff, dim_p), lambda i, k: (i, 0)),          # x rows
        _block_spec((dim_p, th_eff), lambda i, k: (0, k),
                    cfg["weight_buffers"]),                          # W1 chunk
        pl.BlockSpec((1, th_eff), lambda i, k: (0, k)),              # b1 chunk
        _block_spec((th_eff, dim_p), lambda i, k: (k, 0),
                    cfg["weight_buffers"]),                          # W2 chunk
        _block_spec((1, dim_p), lambda i, k: (0, 0),
                    cfg["b2_buffers"]),                              # b2 (const)
    ]
    out_spec = pl.BlockSpec((tm_eff, dim_p), lambda i, k: (i, 0))

    kernel = _mlp_kernel_acc if needs_acc else _mlp_kernel_f32
    scratch = ([pltpu.VMEM((tm_eff, dim_p), jnp.float32)] if needs_acc else [])

    out2d = pl.pallas_call(
        kernel,
        out_shape=jax.ShapeDtypeStruct((n_p, dim_p), x.dtype),
        grid_spec=pltpu.PrefetchScalarGridSpec(
            num_scalar_prefetch=0,
            grid=grid,
            in_specs=in_specs,
            out_specs=out_spec,
            scratch_shapes=scratch,
        ),
        compiler_params=pltpu.CompilerParams(
            dimension_semantics=("parallel", "arbitrary"),
            vmem_limit_bytes=cfg["vmem"]),
        cost_estimate=cost,
    )(x2d, w1_p, b1_p, w2_p, b2_p)

    return out2d[:N, :dim].reshape(B, S, dim)


def _ref_mlp(x, w1, b1, w2, b2):
    h = jnp.dot(x, w1) + b1
    h = jax.nn.gelu(h, approximate=False)
    return jnp.dot(h, w2) + b2


if __name__ == "__main__":
    # Small shapes consistent with the module: batch=2, seq=8, dim=32
    B, S, dim = 2, 8, 32
    hidden = 4 * dim

    key = jax.random.PRNGKey(0)
    kx, k1, k2, k3, k4 = jax.random.split(key, 5)

    x = jax.random.normal(kx, (B, S, dim), dtype=jnp.float32)

    # Deterministic parameter init (Kaiming-uniform-like bounds as in nn.Linear)
    bound1 = 1.0 / jnp.sqrt(dim)
    bound2 = 1.0 / jnp.sqrt(hidden)
    w1 = jax.random.uniform(k1, (dim, hidden), jnp.float32, -bound1, bound1)
    b1 = jax.random.uniform(k2, (hidden,), jnp.float32, -bound1, bound1)
    w2 = jax.random.uniform(k3, (hidden, dim), jnp.float32, -bound2, bound2)
    b2 = jax.random.uniform(k4, (dim,), jnp.float32, -bound2, bound2)

    out = mlp_pallas(x, w1, b1, w2, b2)
    out = jax.block_until_ready(out)

    ref = _ref_mlp(x, w1, b1, w2, b2)
    assert out.shape == (B, S, dim)
    assert jnp.allclose(out, ref, atol=1e-5, rtol=1e-5), "mismatch vs reference"

    print("KERNEL_OK")
</pallas_src>

<mosaic_0001>
module attributes {stable_mosaic.version = 11 : i64} {
  func.func @_mlp_kernel_f32(%arg0: i32, %arg1: i32, %arg2: memref<16x128xf32, #tpu.memory_space<vmem>>, %arg3: memref<128x128xf32, #tpu.memory_space<vmem>>, %arg4: memref<1x128xf32, #tpu.memory_space<vmem>>, %arg5: memref<128x128xf32, #tpu.memory_space<vmem>>, %arg6: memref<1x128xf32, #tpu.memory_space<vmem>>, %arg7: memref<16x128xf32, #tpu.memory_space<vmem>>) attributes {dimension_semantics = [#tpu.dimension_semantics<parallel>, #tpu.dimension_semantics<arbitrary>], iteration_bounds = array<i64: 1, 1>, scalar_prefetch = 0 : i64, scratch_operands = 0 : i64, tpu.core_type = #tpu.core_type<tc>, window_params = [{transform_indices = @transform_0, window_bounds = array<i64: 16, 128>}, {transform_indices = @transform_1, window_bounds = array<i64: 128, 128>}, {transform_indices = @transform_2, window_bounds = array<i64: 1, 128>}, {transform_indices = @transform_3, window_bounds = array<i64: 128, 128>}, {pipeline_mode = #tpu.pipeline_mode<synchronous>, transform_indices = @transform_4, window_bounds = array<i64: 1, 128>}, {transform_indices = @transform_5, window_bounds = array<i64: 16, 128>}]} {
    %c0_i32 = arith.constant 0 : i32
    %0 = arith.cmpi eq, %arg1, %c0_i32 : i32
    %1 = arith.extui %0 : i1 to i32
    %c0_i32_0 = arith.constant 0 : i32
    %2 = arith.cmpi ne, %1, %c0_i32_0 : i32
    scf.if %2 {
      %c0_16 = arith.constant 0 : index
      %c0_17 = arith.constant 0 : index
      %22 = vector.load %arg6[%c0_16, %c0_17] : memref<1x128xf32, #tpu.memory_space<vmem>>, vector<1x128xf32>
      %23 = vector.shape_cast %22 : vector<1x128xf32> to vector<1x128xf32>
      %24 = vector.broadcast %23 : vector<1x128xf32> to vector<16x128xf32>
      %c0_18 = arith.constant 0 : index
      %c0_19 = arith.constant 0 : index
      %25 = vector.load %arg7[%c0_18, %c0_19] : memref<16x128xf32, #tpu.memory_space<vmem>>, vector<16x128xf32>
      tpu.vector_store %arg7[%c0_18, %c0_19], %24 {strides = array<i32>} : memref<16x128xf32, #tpu.memory_space<vmem>>, vector<16x128xf32>,
    } else {
    }
    %c0 = arith.constant 0 : index
    %c0_1 = arith.constant 0 : index
    %3 = vector.load %arg2[%c0, %c0_1] : memref<16x128xf32, #tpu.memory_space<vmem>>, vector<16x128xf32>
    %c0_2 = arith.constant 0 : index
    %c0_3 = arith.constant 0 : index
    %4 = vector.load %arg3[%c0_2, %c0_3] : memref<128x128xf32, #tpu.memory_space<vmem>>, vector<128x128xf32>
    %cst = arith.constant dense<0.000000e+00> : vector<16x128xf32>
    %5 = tpu.matmul %3, %4, %cst {dimension_numbers = #tpu.dot_dimension_numbers<[1], [0], [0], [1], [0, 0, 1, 1], [], []>} : vector<16x128xf32>, vector<128x128xf32>, vector<16x128xf32> -> vector<16x128xf32>
    %c0_4 = arith.constant 0 : index
    %c0_5 = arith.constant 0 : index
    %6 = vector.load %arg4[%c0_4, %c0_5] : memref<1x128xf32, #tpu.memory_space<vmem>>, vector<1x128xf32>
    %7 = vector.broadcast %6 : vector<1x128xf32> to vector<16x128xf32>
    %8 = arith.addf %5, %7 : vector<16x128xf32>
    %cst_6 = arith.constant 5.000000e-01 : f32
    %9 = vector.broadcast %cst_6 : f32 to vector<16x128xf32>
    %10 = arith.mulf %9, %8 : vector<16x128xf32>
    %cst_7 = arith.constant 0.707106769 : f32
    %11 = vector.broadcast %cst_7 : f32 to vector<16x128xf32>
    %12 = arith.mulf %8, %11 : vector<16x128xf32>
    %13 = math.erf %12 : vector<16x128xf32>
    %cst_8 = arith.constant 1.000000e+00 : f32
    %14 = vector.broadcast %cst_8 : f32 to vector<16x128xf32>
    %15 = arith.addf %14, %13 : vector<16x128xf32>
    %16 = arith.mulf %10, %15 : vector<16x128xf32>
    %c0_9 = arith.constant 0 : index
    %c0_10 = arith.constant 0 : index
    %17 = vector.load %arg7[%c0_9, %c0_10] : memref<16x128xf32, #tpu.memory_space<vmem>>, vector<16x128xf32>
    %c0_11 = arith.constant 0 : index
    %c0_12 = arith.constant 0 : index
    %18 = vector.load %arg5[%c0_11, %c0_12] : memref<128x128xf32, #tpu.memory_space<vmem>>, vector<128x128xf32>
    %cst_13 = arith.constant dense<0.000000e+00> : vector<16x128xf32>
    %19 = tpu.matmul %16, %18, %cst_13 {dimension_numbers = #tpu.dot_dimension_numbers<[1], [0], [0], [1], [0, 0, 1, 1], [], []>} : vector<16x128xf32>, vector<128x128xf32>, vector<16x128xf32> -> vector<16x128xf32>
    %20 = arith.addf %17, %19 : vector<16x128xf32>
    %c0_14 = arith.constant 0 : index
    %c0_15 = arith.constant 0 : index
    %21 = vector.load %arg7[%c0_14, %c0_15] : memref<16x128xf32, #tpu.memory_space<vmem>>, vector<16x128xf32>
    tpu.vector_store %arg7[%c0_14, %c0_15], %20 {strides = array<i32>} : memref<16x128xf32, #tpu.memory_space<vmem>>, vector<16x128xf32>,
    return
  }
  func.func @transform_0(%arg0: i32, %arg1: i32) -> (i32, i32) {
    %c0_i32 = arith.constant 0 : i32
    %c0_i32_0 = arith.constant 0 : i32
    return %arg0, %c0_i32 : i32, i32
  }
  func.func @transform_1(%arg0: i32, %arg1: i32) -> (i32, i32) {
    %c0_i32 = arith.constant 0 : i32
    %c0_i32_0 = arith.constant 0 : i32
    return %c0_i32, %arg1 : i32, i32
  }
  func.func @transform_2(%arg0: i32, %arg1: i32) -> (i32, i32) {
    %c0_i32 = arith.constant 0 : i32
    %c0_i32_0 = arith.constant 0 : i32
    return %c0_i32, %arg1 : i32, i32
  }
  func.func @transform_3(%arg0: i32, %arg1: i32) -> (i32, i32) {
    %c0_i32 = arith.constant 0 : i32
    %c0_i32_0 = arith.constant 0 : i32
    return %arg1, %c0_i32 : i32, i32
  }
  func.func @transform_4(%arg0: i32, %arg1: i32) -> (i32, i32) {
    %c0_i32 = arith.constant 0 : i32
    %c0_i32_0 = arith.constant 0 : i32
    %c0_i32_1 = arith.constant 0 : i32
    return %c0_i32, %c0_i32_0 : i32, i32
  }
  func.func @transform_5(%arg0: i32, %arg1: i32) -> (i32, i32) {
    %c0_i32 = arith.constant 0 : i32
    %c0_i32_0 = arith.constant 0 : i32
    return %arg0, %c0_i32 : i32, i32
  }
}

</mosaic_0001>

<llo_original>
// kernel: mlp_pallas.1
$region0: #{mlp_pallas.1}
  #allocation0 [shape = 'u32[]', space=smem, size = 0x4, offset = 0x4, fixed_abs, tag = 'smem constant byte address 0x4 - core index']
  #allocation1 [shape = 'u32[144,128]{1,0:T(1,128)}', space=vmem, size = 0x12000, scoped, tag = 'internal scratch']
  %s0 = inlined_call_operand.hbm [shape: f32[16,128], index: 0, kind: input, shape index: {}]
  %s1 = inlined_call_operand.hbm [shape: f32[128,128], index: 1, kind: input, shape index: {}]
  %s2 = inlined_call_operand.hbm [shape: f32[1,128], index: 2, kind: input, shape index: {}]
  %s3 = inlined_call_operand.hbm [shape: f32[128,128], index: 3, kind: input, shape index: {}]
  %s4 = inlined_call_operand.hbm [shape: f32[1,128], index: 4, kind: input, shape index: {}]
  %s5 = inlined_call_operand.hbm [shape: f32[16,128], index: 5, kind: output, shape index: {}]
  %s6 = sld [smem:[#allocation0]]
  $region54: #{mlp_pallas.1} parent=0
    _
  %s8 = ssub.s32 1, %s6
  %s9 = scalar_select 0, %s8, %s6
  $region1: #{mlp_pallas.1} parent=0
    #allocation2 [shape = 'u8[8192]{0}', space=vmem, size = 0x2000, scoped, tag = 'input window, operand 0, single buffered']
    #allocation3 [shape = 's32[1]{0}', space=sflag, size = 0x4, scoped, tag = 'scoped memory for mlp_pallas.1']
    #allocation4 [shape = 's32[1]{0}', space=sflag, size = 0x4, scoped, tag = 'scoped memory for mlp_pallas.1']
    #allocation5 [shape = 'u8[65536]{0}', space=vmem, size = 0x10000, scoped, tag = 'input window, operand 1, single buffered']
    #allocation6 [shape = 's32[1]{0}', space=sflag, size = 0x4, scoped, tag = 'scoped memory for mlp_pallas.1']
    #allocation7 [shape = 'u8[512]{0}', space=vmem, size = 0x400, scoped, tag = 'input window, operand 2, single buffered']
    #allocation8 [shape = 'u8[65536]{0}', space=vmem, size = 0x10000, scoped, tag = 'input window, operand 3, single buffered']
    #allocation9 [shape = 's32[1]{0}', space=sflag, size = 0x4, scoped, tag = 'scoped memory for mlp_pallas.1']
    #allocation10 [shape = 'u8[512]{0}', space=vmem, size = 0x400, scoped, tag = 'input window, operand 4, single buffered']
    #allocation11 [shape = 'u8[8192]{0}', space=vmem, size = 0x2000, scoped, tag = 'output window, operand 0, single buffered']
    %10 = vsyncpa [#allocation3], 0
    %11 = vsyncpa [#allocation6], 0
    %12 = vsyncpa [#allocation9], 0
    %13 = vsyncpa [#allocation4], 0
    // Predicated region
    $region2: #{mlp_pallas.1} parent=1 // pred_check
      _
    $region3: #{mlp_pallas.1} parent=1 // pred_check_branch
      %15 = sbr.rel (0) target = $region5
    $region4: #{mlp_pallas.1} parent=1 // pred_region
      %s17 = ssub.s32 256, 256
      %18 = vsyncadd [#allocation3], %s17
      %s19 = sshll.u32 [#allocation2], 4
      %s20 = int_to_ptr.vmem [resolvable:$true] %s19
      %25 = dma.hbm_to_vmem [thread:$0]  %s0, 256, %s20, [#allocation3], 128, 128, 8
    $region5: #{mlp_pallas.1} parent=1 // pred_fallthru
      _
    // Predicated region
    $region6: #{mlp_pallas.1} parent=1 // pred_check
      _
    $region7: #{mlp_pallas.1} parent=1 // pred_check_branch
      %27 = sbr.rel (0) target = $region9
    $region8: #{mlp_pallas.1} parent=1 // pred_region
      %s29 = ssub.s32 2048, 2048
      %30 = vsyncadd [#allocation6], %s29
      %s31 = sshll.u32 [#allocation5], 4
      %s32 = int_to_ptr.vmem [resolvable:$true] %s31
      %37 = dma.hbm_to_vmem [thread:$0]  %s1, 2048, %s32, [#allocation6], 128, 128, 8
    $region9: #{mlp_pallas.1} parent=1 // pred_fallthru
      _
    // Predicated region
    $region10: #{mlp_pallas.1} parent=1 // pred_check
      _
    $region11: #{mlp_pallas.1} parent=1 // pred_check_branch
      %39 = sbr.rel (0) target = $region13
    $region12: #{mlp_pallas.1} parent=1 // pred_region
      %s41 = ssub.s32 16, 16
      %42 = vsyncadd [#allocation6], %s41
      %s44 = sshll.u32 [#allocation7], 4
      %s45 = int_to_ptr.vmem [resolvable:$true] %s44
      %47 = dma.hbm_to_vmem [thread:$0]  %s2, 16, %s45, [#allocation6]
    $region13: #{mlp_pallas.1} parent=1 // pred_fallthru
      _
    // Predicated region
    $region14: #{mlp_pallas.1} parent=1 // pred_check
      _
    $region15: #{mlp_pallas.1} parent=1 // pred_check_branch
      %49 = sbr.rel (0) target = $region17
    $region16: #{mlp_pallas.1} parent=1 // pred_region
      %s51 = ssub.s32 2048, 2048
      %52 = vsyncadd [#allocation9], %s51
      %s53 = sshll.u32 [#allocation8], 4
      %s54 = int_to_ptr.vmem [resolvable:$true] %s53
      %59 = dma.hbm_to_vmem [thread:$0]  %s3, 2048, %s54, [#allocation9], 128, 128, 8
    $region17: #{mlp_pallas.1} parent=1 // pred_fallthru
      _
    // Predicated region
    $region18: #{mlp_pallas.1} parent=1 // pred_check
      _
    $region19: #{mlp_pallas.1} parent=1 // pred_check_branch
      %61 = sbr.rel (0) target = $region21
    $region20: #{mlp_pallas.1} parent=1 // pred_region
      %s63 = ssub.s32 16, 16
      %64 = vsyncadd [#allocation9], %s63
      %s66 = sshll.u32 [#allocation10], 4
      %s67 = int_to_ptr.vmem [resolvable:$true] %s66
      %69 = dma.hbm_to_vmem [thread:$0]  %s4, 16, %s67, [#allocation9]
    $region21: #{mlp_pallas.1} parent=1 // pred_fallthru
      _
    // Predicated region
    $region22: #{mlp_pallas.1} parent=1 // pred_check
      _
    $region23: #{mlp_pallas.1} parent=1 // pred_check_branch
      %71 = sbr.rel (0) target = $region25
    $region24: #{mlp_pallas.1} parent=1 // pred_region
      %72 = dma.done [#allocation3], 256
    $region25: #{mlp_pallas.1} parent=1 // pred_fallthru
      _
    // Predicated region
    $region26: #{mlp_pallas.1} parent=1 // pred_check
      _
    $region27: #{mlp_pallas.1} parent=1 // pred_check_branch
      %74 = sbr.rel (0) target = $region29
    $region28: #{mlp_pallas.1} parent=1 // pred_region
      %75 = dma.done [#allocation6], 2048
    $region29: #{mlp_pallas.1} parent=1 // pred_fallthru
      _
    // Predicated region
    $region30: #{mlp_pallas.1} parent=1 // pred_check
      _
    $region31: #{mlp_pallas.1} parent=1 // pred_check_branch
      %77 = sbr.rel (0) target = $region33
    $region32: #{mlp_pallas.1} parent=1 // pred_region
      %78 = dma.done [#allocation6], 16
    $region33: #{mlp_pallas.1} parent=1 // pred_fallthru
      _
    // Predicated region
    $region34: #{mlp_pallas.1} parent=1 // pred_check
      _
    $region35: #{mlp_pallas.1} parent=1 // pred_check_branch
      %80 = sbr.rel (0) target = $region37
    $region36: #{mlp_pallas.1} parent=1 // pred_region
      %81 = dma.done [#allocation9], 2048
    $region37: #{mlp_pallas.1} parent=1 // pred_fallthru
      _
    // Predicated region
    $region38: #{mlp_pallas.1} parent=1 // pred_check
      _
    $region39: #{mlp_pallas.1} parent=1 // pred_check_branch
      %83 = sbr.rel (0) target = $region41
    $region40: #{mlp_pallas.1} parent=1 // pred_region
      %84 = dma.done [#allocation9], 16
    $region41: #{mlp_pallas.1} parent=1 // pred_fallthru
      _
    %p85 = scmp.eq.s32.totalorder 0, 0
    // Predicated region
    $region42: #{mlp_pallas.1} parent=1 // pred_check
      %p86 = pneg %p85
    $region43: #{mlp_pallas.1} parent=1 // pred_check_branch
      %88 = sbr.rel (%p86) target = $region45
    $region44: #{mlp_pallas.1} parent=1 // pred_region
      %v89 = vld [vmem:[#allocation10] sm:$0x1]
      %v91 = vlaneseq
      %v92 = vshrl.u32 %v91, 7
      %v93 = vsub.s32 0, %v92
      %v94 = vrot.slane %v89, %v93
      %96 = vst [vmem:[#allocation11] sm:$0xff] %v94
      %97 = vst [vmem:[#allocation11 + $0x8] sm:$0xff] %v94
    $region45: #{mlp_pallas.1} parent=1 // pred_fallthru
      _
    %v98 = vld [vmem:[#allocation2] sm:$0xff]
    %v99 = vld [vmem:[#allocation2 + $0x8] sm:$0xff]
    %v100 = vld [vmem:[#allocation5] sm:$0xff]
    %v101 = vld [vmem:[#allocation5 + $0x8] sm:$0xff]
    %v102 = vld [vmem:[#allocation5 + $0x10] sm:$0xff]
    %v103 = vld [vmem:[#allocation5 + $0x18] sm:$0xff]
    %v104 = vld [vmem:[#allocation5 + $0x20] sm:$0xff]
    %v105 = vld [vmem:[#allocation5 + $0x28] sm:$0xff]
    %v106 = vld [vmem:[#allocation5 + $0x30] sm:$0xff]
    %v107 = vld [vmem:[#allocation5 + $0x38] sm:$0xff]
    %v108 = vld [vmem:[#allocation5 + $0x40] sm:$0xff]
    %v109 = vld [vmem:[#allocation5 + $0x48] sm:$0xff]
    %v110 = vld [vmem:[#allocation5 + $0x50] sm:$0xff]
    %v111 = vld [vmem:[#allocation5 + $0x58] sm:$0xff]
    %v112 = vld [vmem:[#allocation5 + $0x60] sm:$0xff]
    %v113 = vld [vmem:[#allocation5 + $0x68] sm:$0xff]
    %v114 = vld [vmem:[#allocation5 + $0x70] sm:$0xff]
    %v115 = vld [vmem:[#allocation5 + $0x78] sm:$0xff]
    %v116 = vld [vmem:[#allocation7] sm:$0x1]
    %v118 = vlaneseq
    %v119 = vshrl.u32 %v118, 7
    %v120 = vsub.s32 0, %v119
    %v121 = vrot.slane %v116, %v120
    %123 = vmatprep.subr.mxu0 0.0
    %124 = vmatpush1.msra.mxu0 %v100
    %125 = vmatprep.subr.mxu0 0.0
    %126 = vmatpush1.msra.mxu0 %v101
    %127 = vmatprep.subr.mxu0 0.0
    %128 = vmatpush1.msra.mxu0 %v102
    %129 = vmatprep.subr.mxu0 0.0
    %130 = vmatpush1.msra.mxu0 %v103
    %131 = vmatprep.subr.mxu0 0.0
    %132 = vmatpush1.msra.mxu0 %v104
    %133 = vmatprep.subr.mxu0 0.0
    %134 = vmatpush1.msra.mxu0 %v105
    %135 = vmatprep.subr.mxu0 0.0
    %136 = vmatpush1.msra.mxu0 %v106
    %137 = vmatprep.subr.mxu0 0.0
    %138 = vmatpush1.msra.mxu0 %v107
    %139 = vmatprep.subr.mxu0 0.0
    %140 = vmatpush1.msra.mxu0 %v108
    %141 = vmatprep.subr.mxu0 0.0
    %142 = vmatpush1.msra.mxu0 %v109
    %143 = vmatprep.subr.mxu0 0.0
    %144 = vmatpush1.msra.mxu0 %v110
    %145 = vmatprep.subr.mxu0 0.0
    %146 = vmatpush1.msra.mxu0 %v111
    %147 = vmatprep.subr.mxu0 0.0
    %148 = vmatpush1.msra.mxu0 %v112
    %149 = vmatprep.subr.mxu0 0.0
    %150 = vmatpush1.msra.mxu0 %v113
    %151 = vmatprep.subr.mxu0 0.0
    %152 = vmatpush1.msra.mxu0 %v114
    %153 = vmatprep.subr.mxu0 0.0
    %154 = vmatpush1.msra.mxu0 %v115
    %155 = vmatprep.subr.mxu0 0.0
    %156 = vmatpush1.msra.mxu0 0.0
    %157 = vmatprep.subr.mxu0 0.0
    %158 = vmatpush1.msra.mxu0 0.0
    %159 = vmatprep.subr.mxu0 0.0
    %160 = vmatpush1.msra.mxu0 0.0
    %161 = vmatprep.subr.mxu0 0.0
    %162 = vmatpush1.msra.mxu0 0.0
    %163 = vmatprep.subr.mxu0 0.0
    %164 = vmatpush1.msra.mxu0 0.0
    %165 = vmatprep.subr.mxu0 0.0
    %166 = vmatpush1.msra.mxu0 0.0
    %167 = vmatprep.subr.mxu0 0.0
    %168 = vmatpush1.msra.mxu0 0.0
    %169 = vmatprep.subr.mxu0 0.0
    %170 = vmatpush1.msra.mxu0 0.0
    %171 = vmatprep.subr.mxu0 0.0
    %172 = vmatpush1.msra.mxu0 0.0
    %173 = vmatprep.subr.mxu0 0.0
    %174 = vmatpush1.msra.mxu0 0.0
    %175 = vmatprep.subr.mxu0 0.0
    %176 = vmatpush1.msra.mxu0 0.0
    %177 = vmatprep.subr.mxu0 0.0
    %178 = vmatpush1.msra.mxu0 0.0
    %179 = vmatprep.subr.mxu0 0.0
    %180 = vmatpush1.msra.mxu0 0.0
    %181 = vmatprep.subr.mxu0 0.0
    %182 = vmatpush1.msra.mxu0 0.0
    %183 = vmatprep.subr.mxu0 0.0
    %184 = vmatpush1.msra.mxu0 0.0
    %185 = vmatprep.subr.mxu0 0.0
    %186 = vmatpush1.msra.mxu0 0.0
    %187 = vmatprep.mubr.f32.mxu0 0.0
    %188 = vmatmul.mubr.f32.gmra.mrb[0].mxu0 %v98
    %v189 = vpop.f32.mrb[0].mxu0
    %v190 = vadd.f32 %v121, %v189
    %v191 = vpop.f32.mrb[0].mxu0
    %192 = vmatprep.mubr.f32.mxu0 0.0
    %193 = vmatmul.mubr.f32.gmra.mrb[0].mxu0 %v99
    %v194 = vpop.f32.mrb[0].mxu0
    %v195 = vadd.f32 %v121, %v194
    %v196 = vpop.f32.mrb[0].mxu0
    %197 = vdwg.mxu0
    %v198 = vmul.f32 %v190, 0.5
    %v199 = vmul.f32 %v195, 0.5
    %v200 = vmul.f32 %v190, 0.70710677
    %v201 = vmul.f32 %v195, 0.70710677
    %v202 = verf.f32.pop %v200
    %v203 = verf.f32.pop %v201
    %v204 = vadd.f32 %v202, 1.0
    %v205 = vadd.f32 %v203, 1.0
    %v206 = vmul.f32 %v198, %v204
    %v207 = vmul.f32 %v199, %v205
    %v208 = vld [vmem:[#allocation11] sm:$0xff]
    %v209 = vld [vmem:[#allocation11 + $0x8] sm:$0xff]
    %v210 = vld [vmem:[#allocation8] sm:$0xff]
    %v211 = vld [vmem:[#allocation8 + $0x8] sm:$0xff]
    %v212 = vld [vmem:[#allocation8 + $0x10] sm:$0xff]
    %v213 = vld [vmem:[#allocation8 + $0x18] sm:$0xff]
    %v214 = vld [vmem:[#allocation8 + $0x20] sm:$0xff]
    %v215 = vld [vmem:[#allocation8 + $0x28] sm:$0xff]
    %v216 = vld [vmem:[#allocation8 + $0x30] sm:$0xff]
    %v217 = vld [vmem:[#allocation8 + $0x38] sm:$0xff]
    %v218 = vld [vmem:[#allocation8 + $0x40] sm:$0xff]
    %v219 = vld [vmem:[#allocation8 + $0x48] sm:$0xff]
    %v220 = vld [vmem:[#allocation8 + $0x50] sm:$0xff]
    %v221 = vld [vmem:[#allocation8 + $0x58] sm:$0xff]
    %v222 = vld [vmem:[#allocation8 + $0x60] sm:$0xff]
    %v223 = vld [vmem:[#allocation8 + $0x68] sm:$0xff]
    %v224 = vld [vmem:[#allocation8 + $0x70] sm:$0xff]
    %v225 = vld [vmem:[#allocation8 + $0x78] sm:$0xff]
    %226 = vmatprep.subr.mxu0 0.0
    %227 = vmatpush1.msra.mxu0 %v210
    %228 = vmatprep.subr.mxu0 0.0
    %229 = vmatpush1.msra.mxu0 %v211
    %230 = vmatprep.subr.mxu0 0.0
    %231 = vmatpush1.msra.mxu0 %v212
    %232 = vmatprep.subr.mxu0 0.0
    %233 = vmatpush1.msra.mxu0 %v213
    %234 = vmatprep.subr.mxu0 0.0
    %235 = vmatpush1.msra.mxu0 %v214
    %236 = vmatprep.subr.mxu0 0.0
    %237 = vmatpush1.msra.mxu0 %v215
    %238 = vmatprep.subr.mxu0 0.0
    %239 = vmatpush1.msra.mxu0 %v216
    %240 = vmatprep.subr.mxu0 0.0
    %241 = vmatpush1.msra.mxu0 %v217
    %242 = vmatprep.subr.mxu0 0.0
    %243 = vmatpush1.msra.mxu0 %v218
    %244 = vmatprep.subr.mxu0 0.0
    %245 = vmatpush1.msra.mxu0 %v219
    %246 = vmatprep.subr.mxu0 0.0
    %247 = vmatpush1.msra.mxu0 %v220
    %248 = vmatprep.subr.mxu0 0.0
    %249 = vmatpush1.msra.mxu0 %v221
    %250 = vmatprep.subr.mxu0 0.0
    %251 = vmatpush1.msra.mxu0 %v222
    %252 = vmatprep.subr.mxu0 0.0
    %253 = vmatpush1.msra.mxu0 %v223
    %254 = vmatprep.subr.mxu0 0.0
    %255 = vmatpush1.msra.mxu0 %v224
    %256 = vmatprep.subr.mxu0 0.0
    %257 = vmatpush1.msra.mxu0 %v225
    %258 = vmatprep.subr.mxu0 0.0
    %259 = vmatpush1.msra.mxu0 0.0
    %260 = vmatprep.subr.mxu0 0.0
    %261 = vmatpush1.msra.mxu0 0.0
    %262 = vmatprep.subr.mxu0 0.0
    %263 = vmatpush1.msra.mxu0 0.0
    %264 = vmatprep.subr.mxu0 0.0
    %265 = vmatpush1.msra.mxu0 0.0
    %266 = vmatprep.subr.mxu0 0.0
    %267 = vmatpush1.msra.mxu0 0.0
    %268 = vmatprep.subr.mxu0 0.0
    %269 = vmatpush1.msra.mxu0 0.0
    %270 = vmatprep.subr.mxu0 0.0
    %271 = vmatpush1.msra.mxu0 0.0
    %272 = vmatprep.subr.mxu0 0.0
    %273 = vmatpush1.msra.mxu0 0.0
    %274 = vmatprep.subr.mxu0 0.0
    %275 = vmatpush1.msra.mxu0 0.0
    %276 = vmatprep.subr.mxu0 0.0
    %277 = vmatpush1.msra.mxu0 0.0
    %278 = vmatprep.subr.mxu0 0.0
    %279 = vmatpush1.msra.mxu0 0.0
    %280 = vmatprep.subr.mxu0 0.0
    %281 = vmatpush1.msra.mxu0 0.0
    %282 = vmatprep.subr.mxu0 0.0
    %283 = vmatpush1.msra.mxu0 0.0
    %284 = vmatprep.subr.mxu0 0.0
    %285 = vmatpush1.msra.mxu0 0.0
    %286 = vmatprep.subr.mxu0 0.0
    %287 = vmatpush1.msra.mxu0 0.0
    %288 = vmatprep.subr.mxu0 0.0
    %289 = vmatpush1.msra.mxu0 0.0
    %290 = vmatprep.mubr.f32.mxu0 0.0
    %291 = vmatmul.mubr.f32.gmra.mrb[0].mxu0 %v206
    %v292 = vpop.f32.mrb[0].mxu0
    %v293 = vadd.f32 0.0, %v292
    %v294 = vpop.f32.mrb[0].mxu0
    %295 = vmatprep.mubr.f32.mxu0 0.0
    %296 = vmatmul.mubr.f32.gmra.mrb[0].mxu0 %v207
    %v297 = vpop.f32.mrb[0].mxu0
    %v298 = vadd.f32 0.0, %v297
    %v299 = vpop.f32.mrb[0].mxu0
    %300 = vdwg.mxu0
    %v301 = vadd.f32 %v208, %v293
    %v302 = vadd.f32 %v209, %v298
    %303 = vst [vmem:[#allocation11] sm:$0xff] %v301
    %304 = vst [vmem:[#allocation11 + $0x8] sm:$0xff] %v302
    // Predicated region
    $region46: #{mlp_pallas.1} parent=1 // pred_check
      _
    $region47: #{mlp_pallas.1} parent=1 // pred_check_branch
      %306 = sbr.rel (0) target = $region49
    $region48: #{mlp_pallas.1} parent=1 // pred_region
      %s308 = ssub.s32 256, 256
      %309 = vsyncadd [#allocation4], %s308
      %s310 = sshll.u32 [#allocation11], 4
      %s311 = int_to_ptr.vmem [resolvable:$true] %s310
      %316 = dma.vmem_to_hbm [thread:$0]  %s311, 256, %s5, [#allocation4], 128, 128, 8
    $region49: #{mlp_pallas.1} parent=1 // pred_fallthru
      _
    // Predicated region
    $region50: #{mlp_pallas.1} parent=1 // pred_check
      _
    $region51: #{mlp_pallas.1} parent=1 // pred_check_branch
      %318 = sbr.rel (0) target = $region53
    $region52: #{mlp_pallas.1} parent=1 // pred_region
      %319 = dma.done [#allocation4], 256
    $region53: #{mlp_pallas.1} parent=1 // pred_fallthru
      _
    %320 = vsyncpa [#allocation3], 1
    %321 = vsyncpa [#allocation6], 1
    %322 = vsyncpa [#allocation9], 1
    %323 = vsyncpa [#allocation4], 1

</llo_original>
